<compile_context>
chip_gen: v7x
topology: tpu7x:2x2x1
jax: 0.10.0
libtpu: 0.0.40
codegen_flags: <defaults>
</compile_context>

<pallas_src>
import jax
import jax.numpy as jnp
import numpy as np
from jax import lax
from jax.experimental import pallas as pl
from jax.experimental.pallas import tpu as pltpu

DECAY = 0.2
THRESH = 0.5
N_INPUT = 620     # cfg_fc[0]
N_HIDDEN1 = 200   # cfg_fc[1]  (fc2 output width / state width)


def _round_up(n, m):
    return (n + m - 1) // m * m


def _snn_kernel(x_ref, w_ref, b_ref, out_ref, mem_ref, fc_ref):
    # x_ref  : (TB, TT, Dp) bf16  batch-block x time-block of the (padded) input
    # w_ref  : (Dp, Cp)     bf16  fc2 weight, pre-transposed + padded (resident)
    # b_ref  : (1, Cp)      f32   fc2 bias, padded (resident)
    # out_ref: (TB, Cp)     f32   output block, resident across the time grid axis
    # mem_ref: (TB, Cp)     f32   membrane state carried across time blocks
    # fc_ref : (TT, TB, Cp) f32   time-major fc scratch for the recurrence
    t = pl.program_id(1)  # innermost (time) axis

    @pl.when(t == 0)
    def _():
        # Re-zero per batch block (time is innermost, so this fires for every b).
        mem_ref[...] = jnp.zeros_like(mem_ref)
        out_ref[...] = jnp.zeros_like(out_ref)

    TB, TT, D = x_ref.shape
    C = out_ref.shape[-1]

    # One bf16 batched matmul for all TT time steps of this block, f32 accumulate
    # (amortizes the MXU weight push, tall M = TB*TT).
    x2d = x_ref[...].reshape(TB * TT, D)
    fc = jnp.dot(x2d, w_ref[...], preferred_element_type=jnp.float32)
    fc = (fc + b_ref[...]).reshape(TB, TT, C)
    # One relayout per grid step (hidden under the MXU) -> every recurrence step
    # below is a cheap leading-axis offset instead of a sublane-strided slice.
    fc_ref[...] = pltpu.einshape("btc->tbc", fc)          # (TT, TB, C) time-major

    # Sequential spike/membrane recurrence over the TT steps (f32).
    # spike_{t-1} is a pure function of mem_{t-1}; at t == 0 mem == 0 -> spike == 0.
    mem0 = mem_ref[...]
    spike0 = (mem0 >= THRESH).astype(jnp.float32)
    acc0 = jnp.zeros((TB, C), jnp.float32)

    def step(i, carry):
        mem, spike, acc = carry
        fc_t = fc_ref[i]                                  # (TB, C) leading-axis load
        mem = mem * DECAY * (1.0 - spike) + fc_t
        spike = (mem >= THRESH).astype(jnp.float32)       # TODO(synk): act_fun fixed to Heaviside(0.5)
        return mem, spike, acc + spike

    mem, _, acc = lax.fori_loop(0, TT, step, (mem0, spike0, acc0),
                                unroll=min(8, TT))

    mem_ref[...] = mem
    out_ref[...] = out_ref[...] + acc                     # accumulate spikes into resident output

    @pl.when(t == pl.num_programs(1) - 1)
    def _():
        # Literal /50 as in the PyTorch source (independent of max_time).
        out_ref[...] = out_ref[...] * (1.0 / 50.0)


def _vmem_limit_bytes():
    """~75% of this generation's physical VMEM (96 MiB v5e/v6e, 48 MiB v7x)."""
    try:
        cap = int(pltpu.get_tpu_info().vmem_capacity_bytes)
    except Exception:
        cap = 64 << 20  # conservative (v7x-sized) fallback
    return (cap // 4) * 3


def _tile_candidates(n, step):
    """Sizes legal for a second-to-last block dim: multiples of `step` dividing n, or n itself."""
    cands = {n}
    cands.update(v for v in range(step, n + 1, step) if n % v == 0)
    return sorted(cands, reverse=True)


def _choose_tiles(B, T, Dp, x_budget_bytes, x_itemsize):
    """Pick (TB, TT): largest time block first, then largest batch block, keeping the
    double-buffered x tile within the per-buffer budget.  TB is capped at 32 (vreg
    pressure in the unrolled recurrence) and preferred <= B/2 so v7x's two
    TensorCores both get batch work; relaxed if nothing qualifies."""
    tb_all = _tile_candidates(B, 8)                       # sublane dim of the f32 out/mem block
    tb_pref = [tb for tb in tb_all if tb <= 32 and tb <= max(B // 2, 1)]
    tb_cands = tb_pref if tb_pref else tb_all
    tt_cands = _tile_candidates(T, 16)                    # sublane dim of the bf16 x block
    for tt in tt_cands:
        for tb in tb_cands:
            if 2 * tb * tt * Dp * x_itemsize <= x_budget_bytes:
                return tb, tt
    # TODO(synk): awkward shapes (e.g. large prime T) fall back to the smallest legal
    # tiles which may still exceed the budget; the raised vmem_limit gives headroom.
    return tb_cands[-1], tt_cands[-1]


def snn_forward(x_btd, weight_cd, bias_c):
    """x_btd: (B, T, D); weight_cd: (C, D) (PyTorch Linear layout); bias_c: (C,)."""
    B, T, D = x_btd.shape
    C = weight_cd.shape[0]
    Dp = _round_up(D, 128)   # 620 -> 640
    Cp = _round_up(C, 128)   # 200 -> 256

    # One-off lane-dense pad + bf16 cast (in production the upstream producer
    # should emit x in bf16 directly so this fuses away).  Padded weight rows /
    # columns and bias entries are zero, so padded output columns are exactly 0.
    x_p = jnp.pad(x_btd.astype(jnp.float32), ((0, 0), (0, 0), (0, Dp - D))).astype(jnp.bfloat16)
    w_p = jnp.pad(jnp.transpose(weight_cd).astype(jnp.float32),
                  ((0, Dp - D), (0, Cp - C))).astype(jnp.bfloat16)      # (Dp, Cp)
    b_p = jnp.pad(bias_c.astype(jnp.float32), (0, Cp - C)).reshape(1, Cp)

    vmem_limit = _vmem_limit_bytes()
    TB, TT = _choose_tiles(B, T, Dp, x_budget_bytes=vmem_limit // 5, x_itemsize=2)
    grid = (B // TB, T // TT)                 # (batch blocks, time blocks) — time innermost

    out_padded = pl.pallas_call(
        _snn_kernel,
        out_shape=jax.ShapeDtypeStruct((B, Cp), jnp.float32),
        grid_spec=pltpu.PrefetchScalarGridSpec(
            num_scalar_prefetch=0,
            grid=grid,
            in_specs=[
                # Index time directly on the (B, T, Dp) array: no wrapper transpose.
                pl.BlockSpec((TB, TT, Dp), lambda b, t: (b, t, 0)),
                pl.BlockSpec((Dp, Cp), lambda b, t: (0, 0)),   # weight resident in VMEM
                pl.BlockSpec((1, Cp), lambda b, t: (0, 0)),    # bias resident in VMEM
            ],
            out_specs=pl.BlockSpec((TB, Cp), lambda b, t: (b, 0)),
            scratch_shapes=[
                pltpu.VMEM((TB, Cp), jnp.float32),       # membrane state (spike recomputed from it)
                pltpu.VMEM((TT, TB, Cp), jnp.float32),   # time-major fc for the recurrence
            ],
        ),
        compiler_params=pltpu.CompilerParams(
            # Batch is embarrassingly parallel (v7x megacore); time is the recurrence.
            dimension_semantics=("parallel", "arbitrary"),
            vmem_limit_bytes=int(vmem_limit),
        ),
    )(x_p, w_p, b_p)

    return out_padded[:, :C]


def snn_reference(x_btd, weight_cd, bias_c):
    """Pure-JAX reference.  Uses bf16 matmul operands with f32 accumulation to
    mirror the kernel's numerics (spike thresholding tolerates bf16 rounding)."""
    B, T, D = x_btd.shape
    C = weight_cd.shape[0]
    xb = x_btd.astype(jnp.bfloat16)
    wb = jnp.transpose(weight_cd).astype(jnp.bfloat16)
    bias = bias_c.astype(jnp.float32)
    mem = jnp.zeros((B, C), jnp.float32)
    spike = jnp.zeros((B, C), jnp.float32)
    sumspike = jnp.zeros((B, C), jnp.float32)
    for t in range(T):
        fc = jnp.dot(xb[:, t], wb, preferred_element_type=jnp.float32) + bias
        mem = mem * DECAY * (1.0 - spike) + fc
        spike = (mem >= THRESH).astype(jnp.float32)
        sumspike = sumspike + spike
    return sumspike / 50.0


if __name__ == "__main__":
    key = jax.random.PRNGKey(0)
    k_x, k_w, k_b = jax.random.split(key, 3)

    B, T = 4, 8                      # small batch / short max_time for the example
    D, C = N_INPUT, N_HIDDEN1        # 620, 200 as dictated by the module

    x = jax.random.normal(k_x, (B, T, D), dtype=jnp.float32)
    # Deterministic nn.Linear-style init (uniform in +-1/sqrt(fan_in)).
    bound = 1.0 / np.sqrt(D)
    w = jax.random.uniform(k_w, (C, D), jnp.float32, -bound, bound)
    b = jax.random.uniform(k_b, (C,), jnp.float32, -bound, bound)

    out = jax.block_until_ready(snn_forward(x, w, b))
    ref = snn_reference(x, w, b)

    assert out.shape == (B, C)
    # Spikes are 0/1 counts / 50; tolerate a few threshold flips from MXU vs XLA
    # rounding differences near thresh=0.5 (intentional for an SNN forward).
    np.testing.assert_allclose(np.asarray(out), np.asarray(ref), atol=0.1)

    print("KERNEL_OK")
</pallas_src>

<mosaic_0001>
module attributes {stable_mosaic.version = 11 : i64} {
  func.func @_snn_kernel(%arg0: i32, %arg1: i32, %arg2: memref<4x8x640xbf16, #tpu.memory_space<vmem>>, %arg3: memref<640x256xbf16, #tpu.memory_space<vmem>>, %arg4: memref<1x256xf32, #tpu.memory_space<vmem>>, %arg5: memref<4x256xf32, #tpu.memory_space<vmem>>, %arg6: memref<4x256xf32, #tpu.memory_space<vmem>>, %arg7: memref<8x4x256xf32, #tpu.memory_space<vmem>>) attributes {dimension_semantics = [#tpu.dimension_semantics<parallel>, #tpu.dimension_semantics<arbitrary>], iteration_bounds = array<i64: 1, 1>, scalar_prefetch = 0 : i64, scratch_operands = 2 : i64, tpu.core_type = #tpu.core_type<tc>, window_params = [{transform_indices = @transform_0, window_bounds = array<i64: 4, 8, 640>}, {pipeline_mode = #tpu.pipeline_mode<synchronous>, transform_indices = @transform_1, window_bounds = array<i64: 640, 256>}, {pipeline_mode = #tpu.pipeline_mode<synchronous>, transform_indices = @transform_2, window_bounds = array<i64: 1, 256>}, {transform_indices = @transform_3, window_bounds = array<i64: 4, 256>}]} {
    %c0_i32 = arith.constant 0 : i32
    %0 = arith.cmpi eq, %arg1, %c0_i32 : i32
    %1 = arith.extui %0 : i1 to i32
    %c0_i32_0 = arith.constant 0 : i32
    %2 = arith.cmpi ne, %1, %c0_i32_0 : i32
    scf.if %2 {
      %cst_63 = arith.constant 0.000000e+00 : f32
      %138 = vector.broadcast %cst_63 : f32 to vector<4x256xf32>
      %c0_64 = arith.constant 0 : index
      %c0_65 = arith.constant 0 : index
      %139 = vector.load %arg6[%c0_64, %c0_65] : memref<4x256xf32, #tpu.memory_space<vmem>>, vector<4x256xf32>
      tpu.vector_store %arg6[%c0_64, %c0_65], %138 {strides = array<i32>} : memref<4x256xf32, #tpu.memory_space<vmem>>, vector<4x256xf32>,
      %cst_66 = arith.constant 0.000000e+00 : f32
      %140 = vector.broadcast %cst_66 : f32 to vector<4x256xf32>
      %c0_67 = arith.constant 0 : index
      %c0_68 = arith.constant 0 : index
      %141 = vector.load %arg5[%c0_67, %c0_68] : memref<4x256xf32, #tpu.memory_space<vmem>>, vector<4x256xf32>
      tpu.vector_store %arg5[%c0_67, %c0_68], %140 {strides = array<i32>} : memref<4x256xf32, #tpu.memory_space<vmem>>, vector<4x256xf32>,
    } else {
    }
    %c0 = arith.constant 0 : index
    %c0_1 = arith.constant 0 : index
    %c0_2 = arith.constant 0 : index
    %3 = vector.load %arg2[%c0, %c0_1, %c0_2] : memref<4x8x640xbf16, #tpu.memory_space<vmem>>, vector<4x8x640xbf16>
    %4 = vector.shape_cast %3 : vector<4x8x640xbf16> to vector<32x640xbf16>
    %c0_3 = arith.constant 0 : index
    %c0_4 = arith.constant 0 : index
    %5 = vector.load %arg3[%c0_3, %c0_4] : memref<640x256xbf16, #tpu.memory_space<vmem>>, vector<640x256xbf16>
    %cst = arith.constant dense<0.000000e+00> : vector<32x256xf32>
    %6 = tpu.matmul %4, %5, %cst {dimension_numbers = #tpu.dot_dimension_numbers<[1], [0], [0], [1], [0, 0, 1, 1], [], []>} : vector<32x640xbf16>, vector<640x256xbf16>, vector<32x256xf32> -> vector<32x256xf32>
    %c0_5 = arith.constant 0 : index
    %c0_6 = arith.constant 0 : index
    %7 = vector.load %arg4[%c0_5, %c0_6] : memref<1x256xf32, #tpu.memory_space<vmem>>, vector<1x256xf32>
    %8 = vector.broadcast %7 : vector<1x256xf32> to vector<32x256xf32>
    %9 = arith.addf %6, %8 : vector<32x256xf32>
    %10 = vector.shape_cast %9 : vector<32x256xf32> to vector<4x8x256xf32>
    %11 = tpu.transpose %10, [1, 0, 2] : vector<4x8x256xf32> -> vector<8x4x256xf32>
    %c0_7 = arith.constant 0 : index
    %c0_8 = arith.constant 0 : index
    %c0_9 = arith.constant 0 : index
    %12 = vector.load %arg7[%c0_7, %c0_8, %c0_9] : memref<8x4x256xf32, #tpu.memory_space<vmem>>, vector<8x4x256xf32>
    tpu.vector_store %arg7[%c0_7, %c0_8, %c0_9], %11 {strides = array<i32>} : memref<8x4x256xf32, #tpu.memory_space<vmem>>, vector<8x4x256xf32>,
    %c0_10 = arith.constant 0 : index
    %c0_11 = arith.constant 0 : index
    %13 = vector.load %arg6[%c0_10, %c0_11] : memref<4x256xf32, #tpu.memory_space<vmem>>, vector<4x256xf32>
    %cst_12 = arith.constant 5.000000e-01 : f32
    %14 = vector.broadcast %cst_12 : f32 to vector<4x256xf32>
    %15 = arith.cmpf oge, %13, %14 : vector<4x256xf32>
    %16 = arith.extui %15 : vector<4x256xi1> to vector<4x256xi32>
    %17 = arith.sitofp %16 : vector<4x256xi32> to vector<4x256xf32>
    %cst_13 = arith.constant 0.000000e+00 : f32
    %18 = vector.broadcast %cst_13 : f32 to vector<4x256xf32>
    %c0_i32_14 = arith.constant 0 : i32
    %19 = arith.index_cast %c0_i32_14 : i32 to index
    %c0_15 = arith.constant 0 : index
    %c0_16 = arith.constant 0 : index
    %20 = vector.load %arg7[%19, %c0_15, %c0_16] : memref<8x4x256xf32, #tpu.memory_space<vmem>>, vector<1x4x256xf32>
    %21 = vector.shape_cast %20 : vector<1x4x256xf32> to vector<4x256xf32>
    %cst_17 = arith.constant 2.000000e-01 : f32
    %22 = vector.broadcast %cst_17 : f32 to vector<4x256xf32>
    %23 = arith.mulf %13, %22 : vector<4x256xf32>
    %cst_18 = arith.constant 1.000000e+00 : f32
    %24 = vector.broadcast %cst_18 : f32 to vector<4x256xf32>
    %25 = arith.subf %24, %17 : vector<4x256xf32>
    %26 = arith.mulf %23, %25 : vector<4x256xf32>
    %27 = arith.addf %26, %21 : vector<4x256xf32>
    %cst_19 = arith.constant 5.000000e-01 : f32
    %28 = vector.broadcast %cst_19 : f32 to vector<4x256xf32>
    %29 = arith.cmpf oge, %27, %28 : vector<4x256xf32>
    %30 = arith.extui %29 : vector<4x256xi1> to vector<4x256xi32>
    %31 = arith.sitofp %30 : vector<4x256xi32> to vector<4x256xf32>
    %32 = arith.addf %18, %31 : vector<4x256xf32>
    %c1_i32 = arith.constant 1 : i32
    %33 = arith.index_cast %c1_i32 : i32 to index
    %c0_20 = arith.constant 0 : index
    %c0_21 = arith.constant 0 : index
    %34 = vector.load %arg7[%33, %c0_20, %c0_21] : memref<8x4x256xf32, #tpu.memory_space<vmem>>, vector<1x4x256xf32>
    %35 = vector.shape_cast %34 : vector<1x4x256xf32> to vector<4x256xf32>
    %cst_22 = arith.constant 2.000000e-01 : f32
    %36 = vector.broadcast %cst_22 : f32 to vector<4x256xf32>
    %37 = arith.mulf %27, %36 : vector<4x256xf32>
    %cst_23 = arith.constant 1.000000e+00 : f32
    %38 = vector.broadcast %cst_23 : f32 to vector<4x256xf32>
    %39 = arith.subf %38, %31 : vector<4x256xf32>
    %40 = arith.mulf %37, %39 : vector<4x256xf32>
    %41 = arith.addf %40, %35 : vector<4x256xf32>
    %cst_24 = arith.constant 5.000000e-01 : f32
    %42 = vector.broadcast %cst_24 : f32 to vector<4x256xf32>
    %43 = arith.cmpf oge, %41, %42 : vector<4x256xf32>
    %44 = arith.extui %43 : vector<4x256xi1> to vector<4x256xi32>
    %45 = arith.sitofp %44 : vector<4x256xi32> to vector<4x256xf32>
    %46 = arith.addf %32, %45 : vector<4x256xf32>
    %c2_i32 = arith.constant 2 : i32
    %47 = arith.index_cast %c2_i32 : i32 to index
    %c0_25 = arith.constant 0 : index
    %c0_26 = arith.constant 0 : index
    %48 = vector.load %arg7[%47, %c0_25, %c0_26] : memref<8x4x256xf32, #tpu.memory_space<vmem>>, vector<1x4x256xf32>
    %49 = vector.shape_cast %48 : vector<1x4x256xf32> to vector<4x256xf32>
    %cst_27 = arith.constant 2.000000e-01 : f32
    %50 = vector.broadcast %cst_27 : f32 to vector<4x256xf32>
    %51 = arith.mulf %41, %50 : vector<4x256xf32>
    %cst_28 = arith.constant 1.000000e+00 : f32
    %52 = vector.broadcast %cst_28 : f32 to vector<4x256xf32>
    %53 = arith.subf %52, %45 : vector<4x256xf32>
    %54 = arith.mulf %51, %53 : vector<4x256xf32>
    %55 = arith.addf %54, %49 : vector<4x256xf32>
    %cst_29 = arith.constant 5.000000e-01 : f32
    %56 = vector.broadcast %cst_29 : f32 to vector<4x256xf32>
    %57 = arith.cmpf oge, %55, %56 : vector<4x256xf32>
    %58 = arith.extui %57 : vector<4x256xi1> to vector<4x256xi32>
    %59 = arith.sitofp %58 : vector<4x256xi32> to vector<4x256xf32>
    %60 = arith.addf %46, %59 : vector<4x256xf32>
    %c3_i32 = arith.constant 3 : i32
    %61 = arith.index_cast %c3_i32 : i32 to index
    %c0_30 = arith.constant 0 : index
    %c0_31 = arith.constant 0 : index
    %62 = vector.load %arg7[%61, %c0_30, %c0_31] : memref<8x4x256xf32, #tpu.memory_space<vmem>>, vector<1x4x256xf32>
    %63 = vector.shape_cast %62 : vector<1x4x256xf32> to vector<4x256xf32>
    %cst_32 = arith.constant 2.000000e-01 : f32
    %64 = vector.broadcast %cst_32 : f32 to vector<4x256xf32>
    %65 = arith.mulf %55, %64 : vector<4x256xf32>
    %cst_33 = arith.constant 1.000000e+00 : f32
    %66 = vector.broadcast %cst_33 : f32 to vector<4x256xf32>
    %67 = arith.subf %66, %59 : vector<4x256xf32>
    %68 = arith.mulf %65, %67 : vector<4x256xf32>
    %69 = arith.addf %68, %63 : vector<4x256xf32>
    %cst_34 = arith.constant 5.000000e-01 : f32
    %70 = vector.broadcast %cst_34 : f32 to vector<4x256xf32>
    %71 = arith.cmpf oge, %69, %70 : vector<4x256xf32>
    %72 = arith.extui %71 : vector<4x256xi1> to vector<4x256xi32>
    %73 = arith.sitofp %72 : vector<4x256xi32> to vector<4x256xf32>
    %74 = arith.addf %60, %73 : vector<4x256xf32>
    %c4_i32 = arith.constant 4 : i32
    %75 = arith.index_cast %c4_i32 : i32 to index
    %c0_35 = arith.constant 0 : index
    %c0_36 = arith.constant 0 : index
    %76 = vector.load %arg7[%75, %c0_35, %c0_36] : memref<8x4x256xf32, #tpu.memory_space<vmem>>, vector<1x4x256xf32>
    %77 = vector.shape_cast %76 : vector<1x4x256xf32> to vector<4x256xf32>
    %cst_37 = arith.constant 2.000000e-01 : f32
    %78 = vector.broadcast %cst_37 : f32 to vector<4x256xf32>
    %79 = arith.mulf %69, %78 : vector<4x256xf32>
    %cst_38 = arith.constant 1.000000e+00 : f32
    %80 = vector.broadcast %cst_38 : f32 to vector<4x256xf32>
    %81 = arith.subf %80, %73 : vector<4x256xf32>
    %82 = arith.mulf %79, %81 : vector<4x256xf32>
    %83 = arith.addf %82, %77 : vector<4x256xf32>
    %cst_39 = arith.constant 5.000000e-01 : f32
    %84 = vector.broadcast %cst_39 : f32 to vector<4x256xf32>
    %85 = arith.cmpf oge, %83, %84 : vector<4x256xf32>
    %86 = arith.extui %85 : vector<4x256xi1> to vector<4x256xi32>
    %87 = arith.sitofp %86 : vector<4x256xi32> to vector<4x256xf32>
    %88 = arith.addf %74, %87 : vector<4x256xf32>
    %c5_i32 = arith.constant 5 : i32
    %89 = arith.index_cast %c5_i32 : i32 to index
    %c0_40 = arith.constant 0 : index
    %c0_41 = arith.constant 0 : index
    %90 = vector.load %arg7[%89, %c0_40, %c0_41] : memref<8x4x256xf32, #tpu.memory_space<vmem>>, vector<1x4x256xf32>
    %91 = vector.shape_cast %90 : vector<1x4x256xf32> to vector<4x256xf32>
    %cst_42 = arith.constant 2.000000e-01 : f32
    %92 = vector.broadcast %cst_42 : f32 to vector<4x256xf32>
    %93 = arith.mulf %83, %92 : vector<4x256xf32>
    %cst_43 = arith.constant 1.000000e+00 : f32
    %94 = vector.broadcast %cst_43 : f32 to vector<4x256xf32>
    %95 = arith.subf %94, %87 : vector<4x256xf32>
    %96 = arith.mulf %93, %95 : vector<4x256xf32>
    %97 = arith.addf %96, %91 : vector<4x256xf32>
    %cst_44 = arith.constant 5.000000e-01 : f32
    %98 = vector.broadcast %cst_44 : f32 to vector<4x256xf32>
    %99 = arith.cmpf oge, %97, %98 : vector<4x256xf32>
    %100 = arith.extui %99 : vector<4x256xi1> to vector<4x256xi32>
    %101 = arith.sitofp %100 : vector<4x256xi32> to vector<4x256xf32>
    %102 = arith.addf %88, %101 : vector<4x256xf32>
    %c6_i32 = arith.constant 6 : i32
    %103 = arith.index_cast %c6_i32 : i32 to index
    %c0_45 = arith.constant 0 : index
    %c0_46 = arith.constant 0 : index
    %104 = vector.load %arg7[%103, %c0_45, %c0_46] : memref<8x4x256xf32, #tpu.memory_space<vmem>>, vector<1x4x256xf32>
    %105 = vector.shape_cast %104 : vector<1x4x256xf32> to vector<4x256xf32>
    %cst_47 = arith.constant 2.000000e-01 : f32
    %106 = vector.broadcast %cst_47 : f32 to vector<4x256xf32>
    %107 = arith.mulf %97, %106 : vector<4x256xf32>
    %cst_48 = arith.constant 1.000000e+00 : f32
    %108 = vector.broadcast %cst_48 : f32 to vector<4x256xf32>
    %109 = arith.subf %108, %101 : vector<4x256xf32>
    %110 = arith.mulf %107, %109 : vector<4x256xf32>
    %111 = arith.addf %110, %105 : vector<4x256xf32>
    %cst_49 = arith.constant 5.000000e-01 : f32
    %112 = vector.broadcast %cst_49 : f32 to vector<4x256xf32>
    %113 = arith.cmpf oge, %111, %112 : vector<4x256xf32>
    %114 = arith.extui %113 : vector<4x256xi1> to vector<4x256xi32>
    %115 = arith.sitofp %114 : vector<4x256xi32> to vector<4x256xf32>
    %116 = arith.addf %102, %115 : vector<4x256xf32>
    %c7_i32 = arith.constant 7 : i32
    %117 = arith.index_cast %c7_i32 : i32 to index
    %c0_50 = arith.constant 0 : index
    %c0_51 = arith.constant 0 : index
    %118 = vector.load %arg7[%117, %c0_50, %c0_51] : memref<8x4x256xf32, #tpu.memory_space<vmem>>, vector<1x4x256xf32>
    %119 = vector.shape_cast %118 : vector<1x4x256xf32> to vector<4x256xf32>
    %cst_52 = arith.constant 2.000000e-01 : f32
    %120 = vector.broadcast %cst_52 : f32 to vector<4x256xf32>
    %121 = arith.mulf %111, %120 : vector<4x256xf32>
    %cst_53 = arith.constant 1.000000e+00 : f32
    %122 = vector.broadcast %cst_53 : f32 to vector<4x256xf32>
    %123 = arith.subf %122, %115 : vector<4x256xf32>
    %124 = arith.mulf %121, %123 : vector<4x256xf32>
    %125 = arith.addf %124, %119 : vector<4x256xf32>
    %cst_54 = arith.constant 5.000000e-01 : f32
    %126 = vector.broadcast %cst_54 : f32 to vector<4x256xf32>
    %127 = arith.cmpf oge, %125, %126 : vector<4x256xf32>
    %128 = arith.extui %127 : vector<4x256xi1> to vector<4x256xi32>
    %129 = arith.sitofp %128 : vector<4x256xi32> to vector<4x256xf32>
    %130 = arith.addf %116, %129 : vector<4x256xf32>
    %c8_i32 = arith.constant 8 : i32
    %c0_55 = arith.constant 0 : index
    %c0_56 = arith.constant 0 : index
    %131 = vector.load %arg6[%c0_55, %c0_56] : memref<4x256xf32, #tpu.memory_space<vmem>>, vector<4x256xf32>
    tpu.vector_store %arg6[%c0_55, %c0_56], %125 {strides = array<i32>} : memref<4x256xf32, #tpu.memory_space<vmem>>, vector<4x256xf32>,
    %c0_57 = arith.constant 0 : index
    %c0_58 = arith.constant 0 : index
    %132 = vector.load %arg5[%c0_57, %c0_58] : memref<4x256xf32, #tpu.memory_space<vmem>>, vector<4x256xf32>
    %133 = arith.addf %132, %130 : vector<4x256xf32>
    %c0_59 = arith.constant 0 : index
    %c0_60 = arith.constant 0 : index
    %134 = vector.load %arg5[%c0_59, %c0_60] : memref<4x256xf32, #tpu.memory_space<vmem>>, vector<4x256xf32>
    tpu.vector_store %arg5[%c0_59, %c0_60], %133 {strides = array<i32>} : memref<4x256xf32, #tpu.memory_space<vmem>>, vector<4x256xf32>,
    %c0_i32_61 = arith.constant 0 : i32
    %135 = arith.cmpi eq, %arg1, %c0_i32_61 : i32
    %136 = arith.extui %135 : i1 to i32
    %c0_i32_62 = arith.constant 0 : i32
    %137 = arith.cmpi ne, %136, %c0_i32_62 : i32
    scf.if %137 {
      %c0_63 = arith.constant 0 : index
      %c0_64 = arith.constant 0 : index
      %138 = vector.load %arg5[%c0_63, %c0_64] : memref<4x256xf32, #tpu.memory_space<vmem>>, vector<4x256xf32>
      %cst_65 = arith.constant 2.000000e-02 : f32
      %139 = vector.broadcast %cst_65 : f32 to vector<4x256xf32>
      %140 = arith.mulf %138, %139 : vector<4x256xf32>
      %c0_66 = arith.constant 0 : index
      %c0_67 = arith.constant 0 : index
      %141 = vector.load %arg5[%c0_66, %c0_67] : memref<4x256xf32, #tpu.memory_space<vmem>>, vector<4x256xf32>
      tpu.vector_store %arg5[%c0_66, %c0_67], %140 {strides = array<i32>} : memref<4x256xf32, #tpu.memory_space<vmem>>, vector<4x256xf32>,
    } else {
    }
    return
  }
  func.func @transform_0(%arg0: i32, %arg1: i32) -> (i32, i32, i32) {
    %c0_i32 = arith.constant 0 : i32
    %c0_i32_0 = arith.constant 0 : i32
    return %arg0, %arg1, %c0_i32 : i32, i32, i32
  }
  func.func @transform_1(%arg0: i32, %arg1: i32) -> (i32, i32) {
    %c0_i32 = arith.constant 0 : i32
    %c0_i32_0 = arith.constant 0 : i32
    %c0_i32_1 = arith.constant 0 : i32
    return %c0_i32, %c0_i32_0 : i32, i32
  }
  func.func @transform_2(%arg0: i32, %arg1: i32) -> (i32, i32) {
    %c0_i32 = arith.constant 0 : i32
    %c0_i32_0 = arith.constant 0 : i32
    %c0_i32_1 = arith.constant 0 : i32
    return %c0_i32, %c0_i32_0 : i32, i32
  }
  func.func @transform_3(%arg0: i32, %arg1: i32) -> (i32, i32) {
    %c0_i32 = arith.constant 0 : i32
    %c0_i32_0 = arith.constant 0 : i32
    return %arg0, %c0_i32 : i32, i32
  }
}

</mosaic_0001>

<llo_original>
// kernel: tpu_custom_call.1
$region0: #{tpu_custom_call.1}
  #allocation0 [shape = 'u32[]', space=smem, size = 0x4, offset = 0x4, fixed_abs, tag = 'smem constant byte address 0x4 - core index']
  #allocation1 [shape = 'u32[144,128]{1,0:T(1,128)}', space=vmem, size = 0x12000, scoped, tag = 'internal scratch']
  #allocation2 [shape = 'f32[4,256]{1,0:T(4,128)}', space=vmem, size = 0x1000, scoped, tag = 'scratch operand']
  #allocation3 [shape = 'f32[8,4,256]{2,1,0:T(4,128)}', space=vmem, size = 0x8000, scoped, tag = 'scratch operand']
  %s0 = inlined_call_operand.hbm [shape: bf16[4,8,640], index: 0, kind: input, shape index: {}]
  %s1 = inlined_call_operand.hbm [shape: bf16[640,256], index: 1, kind: input, shape index: {}]
  %s2 = inlined_call_operand.vmem [shape: f32[1,256], index: 2, kind: input, shape index: {}]
  %s3 = inlined_call_operand.hbm [shape: f32[4,256], index: 3, kind: output, shape index: {}]
  %s4 = sld [smem:[#allocation0]]
  $region38: #{tpu_custom_call.1} parent=0
    _
  %s6 = ssub.s32 1, %s4
  %s7 = scalar_select 0, %s6, %s4
  $region1: #{tpu_custom_call.1} parent=0
    #allocation4 [shape = 'u8[40960]{0}', space=vmem, size = 0xa000, scoped, tag = 'input window, operand 0, single buffered']
    #allocation5 [shape = 's32[1]{0}', space=sflag, size = 0x4, scoped, tag = 'scoped memory for tpu_custom_call.1']
    #allocation6 [shape = 's32[1]{0}', space=sflag, size = 0x4, scoped, tag = 'scoped memory for tpu_custom_call.1']
    #allocation7 [shape = 'u8[327680]{0}', space=vmem, size = 0x50000, scoped, tag = 'input window, operand 1, single buffered']
    #allocation8 [shape = 's32[1]{0}', space=sflag, size = 0x4, scoped, tag = 'scoped memory for tpu_custom_call.1']
    #allocation9 [shape = 'u8[4096]{0}', space=vmem, size = 0x1000, scoped, tag = 'output window, operand 0, single buffered']
    %8 = vsyncpa [#allocation5], 0
    %9 = vsyncpa [#allocation8], 0
    %10 = vsyncpa [#allocation6], 0
    // Predicated region
    $region2: #{tpu_custom_call.1} parent=1 // pred_check
      _
    $region3: #{tpu_custom_call.1} parent=1 // pred_check_branch
      %12 = sbr.rel (0) target = $region5
    $region4: #{tpu_custom_call.1} parent=1 // pred_region
      %s14 = ssub.s32 1280, 1280
      %15 = vsyncadd [#allocation5], %s14
      %s16 = sshll.u32 [#allocation4], 4
      %s17 = int_to_ptr.vmem [resolvable:$true] %s16
      %22 = dma.hbm_to_vmem [thread:$0]  %s0, 1280, %s17, [#allocation5], 320, 320, 20
    $region5: #{tpu_custom_call.1} parent=1 // pred_fallthru
      _
    // Predicated region
    $region6: #{tpu_custom_call.1} parent=1 // pred_check
      _
    $region7: #{tpu_custom_call.1} parent=1 // pred_check_branch
      %24 = sbr.rel (0) target = $region9
    $region8: #{tpu_custom_call.1} parent=1 // pred_region
      %s26 = ssub.s32 10240, 10240
      %27 = vsyncadd [#allocation8], %s26
      %s28 = sshll.u32 [#allocation7], 4
      %s29 = int_to_ptr.vmem [resolvable:$true] %s28
      %34 = dma.hbm_to_vmem [thread:$0]  %s1, 10240, %s29, [#allocation8], 128, 128, 8
    $region9: #{tpu_custom_call.1} parent=1 // pred_fallthru
      _
    // Predicated region
    $region10: #{tpu_custom_call.1} parent=1 // pred_check
      _
    $region11: #{tpu_custom_call.1} parent=1 // pred_check_branch
      %36 = sbr.rel (0) target = $region13
    $region12: #{tpu_custom_call.1} parent=1 // pred_region
      _
    $region13: #{tpu_custom_call.1} parent=1 // pred_fallthru
      _
    // Predicated region
    $region14: #{tpu_custom_call.1} parent=1 // pred_check
      _
    $region15: #{tpu_custom_call.1} parent=1 // pred_check_branch
      %38 = sbr.rel (0) target = $region17
    $region16: #{tpu_custom_call.1} parent=1 // pred_region
      %39 = dma.done [#allocation5], 1280
    $region17: #{tpu_custom_call.1} parent=1 // pred_fallthru
      _
    // Predicated region
    $region18: #{tpu_custom_call.1} parent=1 // pred_check
      _
    $region19: #{tpu_custom_call.1} parent=1 // pred_check_branch
      %41 = sbr.rel (0) target = $region21
    $region20: #{tpu_custom_call.1} parent=1 // pred_region
      %42 = dma.done [#allocation8], 10240
    $region21: #{tpu_custom_call.1} parent=1 // pred_fallthru
      _
    %p44 = scmp.eq.s32.totalorder 0, 0
    // Predicated region
    $region22: #{tpu_custom_call.1} parent=1 // pred_check
      %p45 = pneg %p44
    $region23: #{tpu_custom_call.1} parent=1 // pred_check_branch
      %47 = sbr.rel (%p45) target = $region25
    $region24: #{tpu_custom_call.1} parent=1 // pred_region
      %48 = vst [vmem:[#allocation2] sm:$0xff] 0.0
      %49 = vst [vmem:[#allocation9] sm:$0xff] 0.0
    $region25: #{tpu_custom_call.1} parent=1 // pred_fallthru
      _
    %v50 = vld [vmem:[#allocation4] sm:$0xff]
    %v51 = vld [vmem:[#allocation4 + $0x8] sm:$0xff]
    %v52 = vld [vmem:[#allocation4 + $0x10] sm:$0xf]
    %v53 = vld [vmem:[#allocation4 + $0x14] sm:$0xff]
    %v54 = vld [vmem:[#allocation4 + $0x1c] sm:$0xff]
    %v55 = vld [vmem:[#allocation4 + $0x24] sm:$0xf]
    %v56 = vld [vmem:[#allocation4 + $0x28] sm:$0xff]
    %v57 = vld [vmem:[#allocation4 + $0x30] sm:$0xff]
    %v58 = vld [vmem:[#allocation4 + $0x38] sm:$0xf]
    %v59 = vld [vmem:[#allocation4 + $0x3c] sm:$0xff]
    %v60 = vld [vmem:[#allocation4 + $0x44] sm:$0xff]
    %v61 = vld [vmem:[#allocation4 + $0x4c] sm:$0xf]
    %v62 = vld [vmem:[#allocation7] sm:$0xff]
    %v63 = vld [vmem:[#allocation7 + $0x8] sm:$0xff]
    %v64 = vld [vmem:[#allocation7 + $0x10] sm:$0xff]
    %v65 = vld [vmem:[#allocation7 + $0x18] sm:$0xff]
    %v66 = vld [vmem:[#allocation7 + $0x20] sm:$0xff]
    %v67 = vld [vmem:[#allocation7 + $0x28] sm:$0xff]
    %v68 = vld [vmem:[#allocation7 + $0x30] sm:$0xff]
    %v69 = vld [vmem:[#allocation7 + $0x38] sm:$0xff]
    %v70 = vld [vmem:[#allocation7 + $0x40] sm:$0xff]
    %v71 = vld [vmem:[#allocation7 + $0x48] sm:$0xff]
    %v72 = vld [vmem:[#allocation7 + $0x50] sm:$0xff]
    %v73 = vld [vmem:[#allocation7 + $0x58] sm:$0xff]
    %v74 = vld [vmem:[#allocation7 + $0x60] sm:$0xff]
    %v75 = vld [vmem:[#allocation7 + $0x68] sm:$0xff]
    %v76 = vld [vmem:[#allocation7 + $0x70] sm:$0xff]
    %v77 = vld [vmem:[#allocation7 + $0x78] sm:$0xff]
    %v78 = vld [vmem:[#allocation7 + $0x80] sm:$0xff]
    %v79 = vld [vmem:[#allocation7 + $0x88] sm:$0xff]
    %v80 = vld [vmem:[#allocation7 + $0x90] sm:$0xff]
    %v81 = vld [vmem:[#allocation7 + $0x98] sm:$0xff]
    %v82 = vld [vmem:[#allocation7 + $0xa0] sm:$0xff]
    %v83 = vld [vmem:[#allocation7 + $0xa8] sm:$0xff]
    %v84 = vld [vmem:[#allocation7 + $0xb0] sm:$0xff]
    %v85 = vld [vmem:[#allocation7 + $0xb8] sm:$0xff]
    %v86 = vld [vmem:[#allocation7 + $0xc0] sm:$0xff]
    %v87 = vld [vmem:[#allocation7 + $0xc8] sm:$0xff]
    %v88 = vld [vmem:[#allocation7 + $0xd0] sm:$0xff]
    %v89 = vld [vmem:[#allocation7 + $0xd8] sm:$0xff]
    %v90 = vld [vmem:[#allocation7 + $0xe0] sm:$0xff]
    %v91 = vld [vmem:[#allocation7 + $0xe8] sm:$0xff]
    %v92 = vld [vmem:[#allocation7 + $0xf0] sm:$0xff]
    %v93 = vld [vmem:[#allocation7 + $0xf8] sm:$0xff]
    %v94 = vld [vmem:[#allocation7 + $0x100] sm:$0xff]
    %v95 = vld [vmem:[#allocation7 + $0x108] sm:$0xff]
    %v96 = vld [vmem:[#allocation7 + $0x110] sm:$0xff]
    %v97 = vld [vmem:[#allocation7 + $0x118] sm:$0xff]
    %v98 = vld [vmem:[#allocation7 + $0x120] sm:$0xff]
    %v99 = vld [vmem:[#allocation7 + $0x128] sm:$0xff]
    %v100 = vld [vmem:[#allocation7 + $0x130] sm:$0xff]
    %v101 = vld [vmem:[#allocation7 + $0x138] sm:$0xff]
    %v102 = vld [vmem:[#allocation7 + $0x140] sm:$0xff]
    %v103 = vld [vmem:[#allocation7 + $0x148] sm:$0xff]
    %v104 = vld [vmem:[#allocation7 + $0x150] sm:$0xff]
    %v105 = vld [vmem:[#allocation7 + $0x158] sm:$0xff]
    %v106 = vld [vmem:[#allocation7 + $0x160] sm:$0xff]
    %v107 = vld [vmem:[#allocation7 + $0x168] sm:$0xff]
    %v108 = vld [vmem:[#allocation7 + $0x170] sm:$0xff]
    %v109 = vld [vmem:[#allocation7 + $0x178] sm:$0xff]
    %v110 = vld [vmem:[#allocation7 + $0x180] sm:$0xff]
    %v111 = vld [vmem:[#allocation7 + $0x188] sm:$0xff]
    %v112 = vld [vmem:[#allocation7 + $0x190] sm:$0xff]
    %v113 = vld [vmem:[#allocation7 + $0x198] sm:$0xff]
    %v114 = vld [vmem:[#allocation7 + $0x1a0] sm:$0xff]
    %v115 = vld [vmem:[#allocation7 + $0x1a8] sm:$0xff]
    %v116 = vld [vmem:[#allocation7 + $0x1b0] sm:$0xff]
    %v117 = vld [vmem:[#allocation7 + $0x1b8] sm:$0xff]
    %v118 = vld [vmem:[#allocation7 + $0x1c0] sm:$0xff]
    %v119 = vld [vmem:[#allocation7 + $0x1c8] sm:$0xff]
    %v120 = vld [vmem:[#allocation7 + $0x1d0] sm:$0xff]
    %v121 = vld [vmem:[#allocation7 + $0x1d8] sm:$0xff]
    %v122 = vld [vmem:[#allocation7 + $0x1e0] sm:$0xff]
    %v123 = vld [vmem:[#allocation7 + $0x1e8] sm:$0xff]
    %v124 = vld [vmem:[#allocation7 + $0x1f0] sm:$0xff]
    %v125 = vld [vmem:[#allocation7 + $0x1f8] sm:$0xff]
    %v126 = vld [vmem:[#allocation7 + $0x200] sm:$0xff]
    %v127 = vld [vmem:[#allocation7 + $0x208] sm:$0xff]
    %v128 = vld [vmem:[#allocation7 + $0x210] sm:$0xff]
    %v129 = vld [vmem:[#allocation7 + $0x218] sm:$0xff]
    %v130 = vld [vmem:[#allocation7 + $0x220] sm:$0xff]
    %v131 = vld [vmem:[#allocation7 + $0x228] sm:$0xff]
    %v132 = vld [vmem:[#allocation7 + $0x230] sm:$0xff]
    %v133 = vld [vmem:[#allocation7 + $0x238] sm:$0xff]
    %v134 = vld [vmem:[#allocation7 + $0x240] sm:$0xff]
    %v135 = vld [vmem:[#allocation7 + $0x248] sm:$0xff]
    %v136 = vld [vmem:[#allocation7 + $0x250] sm:$0xff]
    %v137 = vld [vmem:[#allocation7 + $0x258] sm:$0xff]
    %v138 = vld [vmem:[#allocation7 + $0x260] sm:$0xff]
    %v139 = vld [vmem:[#allocation7 + $0x268] sm:$0xff]
    %v140 = vld [vmem:[#allocation7 + $0x270] sm:$0xff]
    %v141 = vld [vmem:[#allocation7 + $0x278] sm:$0xff]
    %v142 = vld [vmem:[%s2] sm:$0x3]
    %v144 = vlaneseq
    %v145 = vshrl.u32 %v144, 7
    %v146 = vsub.s32 0, %v145
    %v147 = vrot.slane %v142, %v146
    %v148 = vlaneseq
    %v149 = vshrl.u32 %v148, 7
    %v150 = vsub.s32 1, %v149
    %v151 = vrot.slane %v142, %v150
    %v166 = vunpack.c.l.b16 %v50
    %v167 = vunpack.c.h.b16 %v50
    %v168 = vunpack.c.l.b16 %v51
    %v169 = vunpack.c.h.b16 %v51
    %v170 = vunpack.c.l.b16 %v52
    %v171 = vunpack.c.l.b16 %v53
    %v172 = vunpack.c.h.b16 %v53
    %v173 = vunpack.c.l.b16 %v54
    %v174 = vunpack.c.h.b16 %v54
    %v175 = vunpack.c.l.b16 %v55
    %v176 = vunpack.c.l.b16 %v56
    %v177 = vunpack.c.h.b16 %v56
    %v178 = vunpack.c.l.b16 %v57
    %v179 = vunpack.c.h.b16 %v57
    %v180 = vunpack.c.l.b16 %v58
    %v181 = vunpack.c.l.b16 %v59
    %v182 = vunpack.c.h.b16 %v59
    %v183 = vunpack.c.l.b16 %v60
    %v184 = vunpack.c.h.b16 %v60
    %v185 = vunpack.c.l.b16 %v61
    %v186 = vpack.c.b16 %v171, %v166
    %v187 = vpack.c.b16 %v172, %v167
    %v188 = vpack.c.b16 %v173, %v168
    %v189 = vpack.c.b16 %v174, %v169
    %v190 = vpack.c.b16 %v175, %v170
    %v191 = vpack.c.b16 %v181, %v176
    %v192 = vpack.c.b16 %v182, %v177
    %v193 = vpack.c.b16 %v183, %v178
    %v194 = vpack.c.b16 %v184, %v179
    %v195 = vpack.c.b16 %v185, %v180
    %v286 = vunpack.c.l.b16 %v62
    %v287 = vunpack.c.h.b16 %v62
    %v288 = vunpack.c.l.b16 %v63
    %v289 = vunpack.c.h.b16 %v63
    %v290 = vunpack.c.l.b16 %v64
    %v291 = vunpack.c.h.b16 %v64
    %v292 = vunpack.c.l.b16 %v65
    %v293 = vunpack.c.h.b16 %v65
    %v294 = vunpack.c.l.b16 %v66
    %v295 = vunpack.c.h.b16 %v66
    %v296 = vunpack.c.l.b16 %v67
    %v297 = vunpack.c.h.b16 %v67
    %v298 = vunpack.c.l.b16 %v68
    %v299 = vunpack.c.h.b16 %v68
    %v300 = vunpack.c.l.b16 %v69
    %v301 = vunpack.c.h.b16 %v69
    %v302 = vunpack.c.l.b16 %v70
    %v303 = vunpack.c.h.b16 %v70
    %v304 = vunpack.c.l.b16 %v71
    %v305 = vunpack.c.h.b16 %v71
    %v306 = vunpack.c.l.b16 %v72
    %v307 = vunpack.c.h.b16 %v72
    %v308 = vunpack.c.l.b16 %v73
    %v309 = vunpack.c.h.b16 %v73
    %v310 = vunpack.c.l.b16 %v74
    %v311 = vunpack.c.h.b16 %v74
    %v312 = vunpack.c.l.b16 %v75
    %v313 = vunpack.c.h.b16 %v75
    %v314 = vunpack.c.l.b16 %v76
    %v315 = vunpack.c.h.b16 %v76
    %v316 = vunpack.c.l.b16 %v77
    %v317 = vunpack.c.h.b16 %v77
    %v318 = vunpack.c.l.b16 %v78
    %v319 = vunpack.c.h.b16 %v78
    %v320 = vunpack.c.l.b16 %v79
    %v321 = vunpack.c.h.b16 %v79
    %v322 = vunpack.c.l.b16 %v80
    %v323 = vunpack.c.h.b16 %v80
    %v324 = vunpack.c.l.b16 %v81
    %v325 = vunpack.c.h.b16 %v81
    %v326 = vunpack.c.l.b16 %v82
    %v327 = vunpack.c.h.b16 %v82
    %v328 = vunpack.c.l.b16 %v83
    %v329 = vunpack.c.h.b16 %v83
    %v330 = vunpack.c.l.b16 %v84
    %v331 = vunpack.c.h.b16 %v84
    %v332 = vunpack.c.l.b16 %v85
    %v333 = vunpack.c.h.b16 %v85
    %v334 = vunpack.c.l.b16 %v86
    %v335 = vunpack.c.h.b16 %v86
    %v336 = vunpack.c.l.b16 %v87
    %v337 = vunpack.c.h.b16 %v87
    %v338 = vunpack.c.l.b16 %v88
    %v339 = vunpack.c.h.b16 %v88
    %v340 = vunpack.c.l.b16 %v89
    %v341 = vunpack.c.h.b16 %v89
    %v342 = vunpack.c.l.b16 %v90
    %v343 = vunpack.c.h.b16 %v90
    %v344 = vunpack.c.l.b16 %v91
    %v345 = vunpack.c.h.b16 %v91
    %v346 = vunpack.c.l.b16 %v92
    %v347 = vunpack.c.h.b16 %v92
    %v348 = vunpack.c.l.b16 %v93
    %v349 = vunpack.c.h.b16 %v93
    %v350 = vunpack.c.l.b16 %v94
    %v351 = vunpack.c.h.b16 %v94
    %v352 = vunpack.c.l.b16 %v95
    %v353 = vunpack.c.h.b16 %v95
    %v354 = vunpack.c.l.b16 %v96
    %v355 = vunpack.c.h.b16 %v96
    %v356 = vunpack.c.l.b16 %v97
    %v357 = vunpack.c.h.b16 %v97
    %v358 = vunpack.c.l.b16 %v98
    %v359 = vunpack.c.h.b16 %v98
    %v360 = vunpack.c.l.b16 %v99
    %v361 = vunpack.c.h.b16 %v99
    %v362 = vunpack.c.l.b16 %v100
    %v363 = vunpack.c.h.b16 %v100
    %v364 = vunpack.c.l.b16 %v101
    %v365 = vunpack.c.h.b16 %v101
    %v366 = vunpack.c.l.b16 %v102
    %v367 = vunpack.c.h.b16 %v102
    %v368 = vunpack.c.l.b16 %v103
    %v369 = vunpack.c.h.b16 %v103
    %v370 = vunpack.c.l.b16 %v104
    %v371 = vunpack.c.h.b16 %v104
    %v372 = vunpack.c.l.b16 %v105
    %v373 = vunpack.c.h.b16 %v105
    %v374 = vunpack.c.l.b16 %v106
    %v375 = vunpack.c.h.b16 %v106
    %v376 = vunpack.c.l.b16 %v107
    %v377 = vunpack.c.h.b16 %v107
    %v378 = vunpack.c.l.b16 %v108
    %v379 = vunpack.c.h.b16 %v108
    %v380 = vunpack.c.l.b16 %v109
    %v381 = vunpack.c.h.b16 %v109
    %v382 = vunpack.c.l.b16 %v110
    %v383 = vunpack.c.h.b16 %v110
    %v384 = vunpack.c.l.b16 %v111
    %v385 = vunpack.c.h.b16 %v111
    %v386 = vunpack.c.l.b16 %v112
    %v387 = vunpack.c.h.b16 %v112
    %v388 = vunpack.c.l.b16 %v113
    %v389 = vunpack.c.h.b16 %v113
    %v390 = vunpack.c.l.b16 %v114
    %v391 = vunpack.c.h.b16 %v114
    %v392 = vunpack.c.l.b16 %v115
    %v393 = vunpack.c.h.b16 %v115
    %v394 = vunpack.c.l.b16 %v116
    %v395 = vunpack.c.h.b16 %v116
    %v396 = vunpack.c.l.b16 %v117
    %v397 = vunpack.c.h.b16 %v117
    %v398 = vunpack.c.l.b16 %v118
    %v399 = vunpack.c.h.b16 %v118
    %v400 = vunpack.c.l.b16 %v119
    %v401 = vunpack.c.h.b16 %v119
    %v402 = vunpack.c.l.b16 %v120
    %v403 = vunpack.c.h.b16 %v120
    %v404 = vunpack.c.l.b16 %v121
    %v405 = vunpack.c.h.b16 %v121
    %v406 = vunpack.c.l.b16 %v122
    %v407 = vunpack.c.h.b16 %v122
    %v408 = vunpack.c.l.b16 %v123
    %v409 = vunpack.c.h.b16 %v123
    %v410 = vunpack.c.l.b16 %v124
    %v411 = vunpack.c.h.b16 %v124
    %v412 = vunpack.c.l.b16 %v125
    %v413 = vunpack.c.h.b16 %v125
    %v414 = vunpack.c.l.b16 %v126
    %v415 = vunpack.c.h.b16 %v126
    %v416 = vunpack.c.l.b16 %v127
    %v417 = vunpack.c.h.b16 %v127
    %v418 = vunpack.c.l.b16 %v128
    %v419 = vunpack.c.h.b16 %v128
    %v420 = vunpack.c.l.b16 %v129
    %v421 = vunpack.c.h.b16 %v129
    %v422 = vunpack.c.l.b16 %v130
    %v423 = vunpack.c.h.b16 %v130
    %v424 = vunpack.c.l.b16 %v131
    %v425 = vunpack.c.h.b16 %v131
    %v426 = vunpack.c.l.b16 %v132
    %v427 = vunpack.c.h.b16 %v132
    %v428 = vunpack.c.l.b16 %v133
    %v429 = vunpack.c.h.b16 %v133
    %v430 = vunpack.c.l.b16 %v134
    %v431 = vunpack.c.h.b16 %v134
    %v432 = vunpack.c.l.b16 %v135
    %v433 = vunpack.c.h.b16 %v135
    %v434 = vunpack.c.l.b16 %v136
    %v435 = vunpack.c.h.b16 %v136
    %v436 = vunpack.c.l.b16 %v137
    %v437 = vunpack.c.h.b16 %v137
    %v438 = vunpack.c.l.b16 %v138
    %v439 = vunpack.c.h.b16 %v138
    %v440 = vunpack.c.l.b16 %v139
    %v441 = vunpack.c.h.b16 %v139
    %v442 = vunpack.c.l.b16 %v140
    %v443 = vunpack.c.h.b16 %v140
    %v444 = vunpack.c.l.b16 %v141
    %v445 = vunpack.c.h.b16 %v141
    %v446 = vpack.c.b16 %v288, %v286
    %v447 = vpack.c.b16 %v289, %v287
    %v448 = vpack.c.b16 %v292, %v290
    %v449 = vpack.c.b16 %v293, %v291
    %v450 = vpack.c.b16 %v296, %v294
    %v451 = vpack.c.b16 %v297, %v295
    %v452 = vpack.c.b16 %v300, %v298
    %v453 = vpack.c.b16 %v301, %v299
    %v454 = vpack.c.b16 %v304, %v302
    %v455 = vpack.c.b16 %v305, %v303
    %v456 = vpack.c.b16 %v308, %v306
    %v457 = vpack.c.b16 %v309, %v307
    %v458 = vpack.c.b16 %v312, %v310
    %v459 = vpack.c.b16 %v313, %v311
    %v460 = vpack.c.b16 %v316, %v314
    %v461 = vpack.c.b16 %v317, %v315
    %v462 = vpack.c.b16 %v320, %v318
    %v463 = vpack.c.b16 %v321, %v319
    %v464 = vpack.c.b16 %v324, %v322
    %v465 = vpack.c.b16 %v325, %v323
    %v466 = vpack.c.b16 %v328, %v326
    %v467 = vpack.c.b16 %v329, %v327
    %v468 = vpack.c.b16 %v332, %v330
    %v469 = vpack.c.b16 %v333, %v331
    %v470 = vpack.c.b16 %v336, %v334
    %v471 = vpack.c.b16 %v337, %v335
    %v472 = vpack.c.b16 %v340, %v338
    %v473 = vpack.c.b16 %v341, %v339
    %v474 = vpack.c.b16 %v344, %v342
    %v475 = vpack.c.b16 %v345, %v343
    %v476 = vpack.c.b16 %v348, %v346
    %v477 = vpack.c.b16 %v349, %v347
    %v478 = vpack.c.b16 %v352, %v350
    %v479 = vpack.c.b16 %v353, %v351
    %v480 = vpack.c.b16 %v356, %v354
    %v481 = vpack.c.b16 %v357, %v355
    %v482 = vpack.c.b16 %v360, %v358
    %v483 = vpack.c.b16 %v361, %v359
    %v484 = vpack.c.b16 %v364, %v362
    %v485 = vpack.c.b16 %v365, %v363
    %v486 = vpack.c.b16 %v368, %v366
    %v487 = vpack.c.b16 %v369, %v367
    %v488 = vpack.c.b16 %v372, %v370
    %v489 = vpack.c.b16 %v373, %v371
    %v490 = vpack.c.b16 %v376, %v374
    %v491 = vpack.c.b16 %v377, %v375
    %v492 = vpack.c.b16 %v380, %v378
    %v493 = vpack.c.b16 %v381, %v379
    %v494 = vpack.c.b16 %v384, %v382
    %v495 = vpack.c.b16 %v385, %v383
    %v496 = vpack.c.b16 %v388, %v386
    %v497 = vpack.c.b16 %v389, %v387
    %v498 = vpack.c.b16 %v392, %v390
    %v499 = vpack.c.b16 %v393, %v391
    %v500 = vpack.c.b16 %v396, %v394
    %v501 = vpack.c.b16 %v397, %v395
    %v502 = vpack.c.b16 %v400, %v398
    %v503 = vpack.c.b16 %v401, %v399
    %v504 = vpack.c.b16 %v404, %v402
    %v505 = vpack.c.b16 %v405, %v403
    %v506 = vpack.c.b16 %v408, %v406
    %v507 = vpack.c.b16 %v409, %v407
    %v508 = vpack.c.b16 %v412, %v410
    %v509 = vpack.c.b16 %v413, %v411
    %v510 = vpack.c.b16 %v416, %v414
    %v511 = vpack.c.b16 %v417, %v415
    %v512 = vpack.c.b16 %v420, %v418
    %v513 = vpack.c.b16 %v421, %v419
    %v514 = vpack.c.b16 %v424, %v422
    %v515 = vpack.c.b16 %v425, %v423
    %v516 = vpack.c.b16 %v428, %v426
    %v517 = vpack.c.b16 %v429, %v427
    %v518 = vpack.c.b16 %v432, %v430
    %v519 = vpack.c.b16 %v433, %v431
    %v520 = vpack.c.b16 %v436, %v434
    %v521 = vpack.c.b16 %v437, %v435
    %v522 = vpack.c.b16 %v440, %v438
    %v523 = vpack.c.b16 %v441, %v439
    %v524 = vpack.c.b16 %v444, %v442
    %v525 = vpack.c.b16 %v445, %v443
    %606 = vmatprep.subr.bf16.mxu0 %v447
    %607 = vmatpush1.bf16.msra.mxu0 %v446
    %608 = vmatprep.subr.bf16.mxu0 %v449
    %609 = vmatpush1.bf16.msra.mxu0 %v448
    %610 = vmatprep.subr.bf16.mxu0 %v451
    %611 = vmatpush1.bf16.msra.mxu0 %v450
    %612 = vmatprep.subr.bf16.mxu0 %v453
    %613 = vmatpush1.bf16.msra.mxu0 %v452
    %614 = vmatprep.subr.bf16.mxu0 %v455
    %615 = vmatpush1.bf16.msra.mxu0 %v454
    %616 = vmatprep.subr.bf16.mxu0 %v457
    %617 = vmatpush1.bf16.msra.mxu0 %v456
    %618 = vmatprep.subr.bf16.mxu0 %v459
    %619 = vmatpush1.bf16.msra.mxu0 %v458
    %620 = vmatprep.subr.bf16.mxu0 %v461
    %621 = vmatpush1.bf16.msra.mxu0 %v460
    %622 = vmatprep.subr.bf16.mxu0 %v463
    %623 = vmatpush1.bf16.msra.mxu0 %v462
    %624 = vmatprep.subr.bf16.mxu0 %v465
    %625 = vmatpush1.bf16.msra.mxu0 %v464
    %626 = vmatprep.subr.bf16.mxu0 %v467
    %627 = vmatpush1.bf16.msra.mxu0 %v466
    %628 = vmatprep.subr.bf16.mxu0 %v469
    %629 = vmatpush1.bf16.msra.mxu0 %v468
    %630 = vmatprep.subr.bf16.mxu0 %v471
    %631 = vmatpush1.bf16.msra.mxu0 %v470
    %632 = vmatprep.subr.bf16.mxu0 %v473
    %633 = vmatpush1.bf16.msra.mxu0 %v472
    %634 = vmatprep.subr.bf16.mxu0 %v475
    %635 = vmatpush1.bf16.msra.mxu0 %v474
    %636 = vmatprep.subr.bf16.mxu0 %v477
    %637 = vmatpush1.bf16.msra.mxu0 %v476
    %638 = vmatprep.mubr.bf16.mxu0 %v187
    %639 = vmatmul.mubr.bf16.gmra.mrb[0].mxu0 %v186
    %v640 = vpop.f32.mrb[0].mxu0
    %v641 = vadd.f32 %v147, %v640
    %v642 = vpop.f32.mrb[0].mxu0
    %v643 = vadd.f32 %v151, %v642
    %v644 = vpop.f32.mrb[0].mxu0
    %v645 = vadd.f32 %v147, %v644
    %v646 = vpop.f32.mrb[0].mxu0
    %v647 = vadd.f32 %v151, %v646
    %648 = vmatprep.mubr.bf16.mxu0 %v192
    %649 = vmatmul.mubr.bf16.gmra.mrb[0].mxu0 %v191
    %v650 = vpop.f32.mrb[0].mxu0
    %v651 = vadd.f32 %v147, %v650
    %v652 = vpop.f32.mrb[0].mxu0
    %v653 = vadd.f32 %v151, %v652
    %v654 = vpop.f32.mrb[0].mxu0
    %v655 = vadd.f32 %v147, %v654
    %v656 = vpop.f32.mrb[0].mxu0
    %v657 = vadd.f32 %v151, %v656
    %658 = vdwg.mxu0
    %659 = vmatprep.subr.bf16.mxu0 %v479
    %660 = vmatpush1.bf16.msra.mxu0 %v478
    %661 = vmatprep.subr.bf16.mxu0 %v481
    %662 = vmatpush1.bf16.msra.mxu0 %v480
    %663 = vmatprep.subr.bf16.mxu0 %v483
    %664 = vmatpush1.bf16.msra.mxu0 %v482
    %665 = vmatprep.subr.bf16.mxu0 %v485
    %666 = vmatpush1.bf16.msra.mxu0 %v484
    %667 = vmatprep.subr.bf16.mxu0 %v487
    %668 = vmatpush1.bf16.msra.mxu0 %v486
    %669 = vmatprep.subr.bf16.mxu0 %v489
    %670 = vmatpush1.bf16.msra.mxu0 %v488
    %671 = vmatprep.subr.bf16.mxu0 %v491
    %672 = vmatpush1.bf16.msra.mxu0 %v490
    %673 = vmatprep.subr.bf16.mxu0 %v493
    %674 = vmatpush1.bf16.msra.mxu0 %v492
    %675 = vmatprep.subr.bf16.mxu0 %v495
    %676 = vmatpush1.bf16.msra.mxu0 %v494
    %677 = vmatprep.subr.bf16.mxu0 %v497
    %678 = vmatpush1.bf16.msra.mxu0 %v496
    %679 = vmatprep.subr.bf16.mxu0 %v499
    %680 = vmatpush1.bf16.msra.mxu0 %v498
    %681 = vmatprep.subr.bf16.mxu0 %v501
    %682 = vmatpush1.bf16.msra.mxu0 %v500
    %683 = vmatprep.subr.bf16.mxu0 %v503
    %684 = vmatpush1.bf16.msra.mxu0 %v502
    %685 = vmatprep.subr.bf16.mxu0 %v505
    %686 = vmatpush1.bf16.msra.mxu0 %v504
    %687 = vmatprep.subr.bf16.mxu0 %v507
    %688 = vmatpush1.bf16.msra.mxu0 %v506
    %689 = vmatprep.subr.bf16.mxu0 %v509
    %690 = vmatpush1.bf16.msra.mxu0 %v508
    %691 = vmatprep.mubr.bf16.mxu0 %v189
    %692 = vmatmul.mubr.bf16.gmra.mrb[0].mxu0 %v188
    %v693 = vpop.f32.mrb[0].mxu0
    %v694 = vadd.f32 %v641, %v693
    %v695 = vpop.f32.mrb[0].mxu0
    %v696 = vadd.f32 %v643, %v695
    %v697 = vpop.f32.mrb[0].mxu0
    %v698 = vadd.f32 %v645, %v697
    %v699 = vpop.f32.mrb[0].mxu0
    %v700 = vadd.f32 %v647, %v699
    %701 = vmatprep.mubr.bf16.mxu0 %v194
    %702 = vmatmul.mubr.bf16.gmra.mrb[0].mxu0 %v193
    %v703 = vpop.f32.mrb[0].mxu0
    %v704 = vadd.f32 %v651, %v703
    %v705 = vpop.f32.mrb[0].mxu0
    %v706 = vadd.f32 %v653, %v705
    %v707 = vpop.f32.mrb[0].mxu0
    %v708 = vadd.f32 %v655, %v707
    %v709 = vpop.f32.mrb[0].mxu0
    %v710 = vadd.f32 %v657, %v709
    %711 = vdwg.mxu0
    %712 = vmatprep.subr.bf16.mxu0 %v511
    %713 = vmatpush1.bf16.msra.mxu0 %v510
    %714 = vmatprep.subr.bf16.mxu0 %v513
    %715 = vmatpush1.bf16.msra.mxu0 %v512
    %716 = vmatprep.subr.bf16.mxu0 %v515
    %717 = vmatpush1.bf16.msra.mxu0 %v514
    %718 = vmatprep.subr.bf16.mxu0 %v517
    %719 = vmatpush1.bf16.msra.mxu0 %v516
    %720 = vmatprep.subr.bf16.mxu0 %v519
    %721 = vmatpush1.bf16.msra.mxu0 %v518
    %722 = vmatprep.subr.bf16.mxu0 %v521
    %723 = vmatpush1.bf16.msra.mxu0 %v520
    %724 = vmatprep.subr.bf16.mxu0 %v523
    %725 = vmatpush1.bf16.msra.mxu0 %v522
    %726 = vmatprep.subr.bf16.mxu0 %v525
    %727 = vmatpush1.bf16.msra.mxu0 %v524
    %728 = vmatprep.subr.bf16.mxu0 0
    %729 = vmatpush1.bf16.msra.mxu0 0
    %730 = vmatprep.subr.bf16.mxu0 0
    %731 = vmatpush1.bf16.msra.mxu0 0
    %732 = vmatprep.subr.bf16.mxu0 0
    %733 = vmatpush1.bf16.msra.mxu0 0
    %734 = vmatprep.subr.bf16.mxu0 0
    %735 = vmatpush1.bf16.msra.mxu0 0
    %736 = vmatprep.subr.bf16.mxu0 0
    %737 = vmatpush1.bf16.msra.mxu0 0
    %738 = vmatprep.subr.bf16.mxu0 0
    %739 = vmatpush1.bf16.msra.mxu0 0
    %740 = vmatprep.subr.bf16.mxu0 0
    %741 = vmatpush1.bf16.msra.mxu0 0
    %742 = vmatprep.subr.bf16.mxu0 0
    %743 = vmatpush1.bf16.msra.mxu0 0
    %744 = vmatprep.mubr.bf16.mxu0 0
    %745 = vmatmul.mubr.bf16.gmra.mrb[0].mxu0 %v190
    %v746 = vpop.f32.mrb[0].mxu0
    %v747 = vadd.f32 %v694, %v746
    %v748 = vpop.f32.mrb[0].mxu0
    %v749 = vadd.f32 %v696, %v748
    %v750 = vpop.f32.mrb[0].mxu0
    %v751 = vadd.f32 %v698, %v750
    %v752 = vpop.f32.mrb[0].mxu0
    %v753 = vadd.f32 %v700, %v752
    %754 = vmatprep.mubr.bf16.mxu0 0
    %755 = vmatmul.mubr.bf16.gmra.mrb[0].mxu0 %v195
    %v756 = vpop.f32.mrb[0].mxu0
    %v757 = vadd.f32 %v704, %v756
    %v758 = vpop.f32.mrb[0].mxu0
    %v759 = vadd.f32 %v706, %v758
    %v760 = vpop.f32.mrb[0].mxu0
    %v761 = vadd.f32 %v708, %v760
    %v762 = vpop.f32.mrb[0].mxu0
    %v763 = vadd.f32 %v710, %v762
    %764 = vdwg.mxu0
    %v773 = vcombine.low %v747, %v749
    %v774 = vcombine.high %v747, %v749
    %v775 = vcombine.low %v751, %v753
    %v776 = vcombine.high %v751, %v753
    %v777 = vcombine.low %v757, %v759
    %v778 = vcombine.high %v757, %v759
    %v779 = vcombine.low %v761, %v763
    %v780 = vcombine.high %v761, %v763
    %v789 = vcombine.low %v773, %v777
    %v790 = vcombine.high %v773, %v777
    %v792 = vunpack.c.l.s4 1983009808
    %v793 = vunpack.c.0.s8 %v792
    %v794 = vlaneseq
    %v795 = vshrl.u32 %v794, 7
    %v796 = vsub.s32 %v793, %v795
    %v797 = vrot.slane %v789, %v796
    %v799 = vunpack.c.l.s4 1983009808
    %v800 = vunpack.c.0.s8 %v799
    %v801 = vlaneseq
    %v802 = vshrl.u32 %v801, 7
    %v803 = vsub.s32 %v800, %v802
    %v804 = vrot.slane %v790, %v803
    %v805 = vcombine.low %v775, %v779
    %v806 = vcombine.high %v775, %v779
    %v808 = vunpack.c.l.s4 1983009808
    %v809 = vunpack.c.0.s8 %v808
    %v810 = vlaneseq
    %v811 = vshrl.u32 %v810, 7
    %v812 = vsub.s32 %v809, %v811
    %v813 = vrot.slane %v805, %v812
    %v815 = vunpack.c.l.s4 1983009808
    %v816 = vunpack.c.0.s8 %v815
    %v817 = vlaneseq
    %v818 = vshrl.u32 %v817, 7
    %v819 = vsub.s32 %v816, %v818
    %v820 = vrot.slane %v806, %v819
    %v821 = vcombine.low %v797, %v813
    %v822 = vcombine.high %v797, %v813
    %v824 = vunpack.c.l.s4 1934713408
    %v825 = vunpack.c.0.s8 %v824
    %v826 = vlaneseq
    %v827 = vshrl.u32 %v826, 7
    %v828 = vsub.s32 %v825, %v827
    %v829 = vrot.slane %v821, %v828
    %v831 = vunpack.c.l.s4 1934713408
    %v832 = vunpack.c.0.s8 %v831
    %v833 = vlaneseq
    %v834 = vshrl.u32 %v833, 7
    %v835 = vsub.s32 %v832, %v834
    %v836 = vrot.slane %v822, %v835
    %v837 = vcombine.low %v804, %v820
    %v838 = vcombine.high %v804, %v820
    %v840 = vunpack.c.l.s4 1934713408
    %v841 = vunpack.c.0.s8 %v840
    %v842 = vlaneseq
    %v843 = vshrl.u32 %v842, 7
    %v844 = vsub.s32 %v841, %v843
    %v845 = vrot.slane %v837, %v844
    %v847 = vunpack.c.l.s4 1934713408
    %v848 = vunpack.c.0.s8 %v847
    %v849 = vlaneseq
    %v850 = vshrl.u32 %v849, 7
    %v851 = vsub.s32 %v848, %v850
    %v852 = vrot.slane %v838, %v851
    %v853 = vcombine.low %v829, %v845
    %v854 = vcombine.high %v829, %v845
    %v855 = vcombine.low %v836, %v852
    %v856 = vcombine.high %v836, %v852
    %v857 = vcombine.low %v774, %v778
    %v858 = vcombine.high %v774, %v778
    %v860 = vunpack.c.l.s4 1983009808
    %v861 = vunpack.c.0.s8 %v860
    %v862 = vlaneseq
    %v863 = vshrl.u32 %v862, 7
    %v864 = vsub.s32 %v861, %v863
    %v865 = vrot.slane %v857, %v864
    %v867 = vunpack.c.l.s4 1983009808
    %v868 = vunpack.c.0.s8 %v867
    %v869 = vlaneseq
    %v870 = vshrl.u32 %v869, 7
    %v871 = vsub.s32 %v868, %v870
    %v872 = vrot.slane %v858, %v871
    %v873 = vcombine.low %v776, %v780
    %v874 = vcombine.high %v776, %v780
    %v876 = vunpack.c.l.s4 1983009808
    %v877 = vunpack.c.0.s8 %v876
    %v878 = vlaneseq
    %v879 = vshrl.u32 %v878, 7
    %v880 = vsub.s32 %v877, %v879
    %v881 = vrot.slane %v873, %v880
    %v883 = vunpack.c.l.s4 1983009808
    %v884 = vunpack.c.0.s8 %v883
    %v885 = vlaneseq
    %v886 = vshrl.u32 %v885, 7
    %v887 = vsub.s32 %v884, %v886
    %v888 = vrot.slane %v874, %v887
    %v889 = vcombine.low %v865, %v881
    %v890 = vcombine.high %v865, %v881
    %v892 = vunpack.c.l.s4 1934713408
    %v893 = vunpack.c.0.s8 %v892
    %v894 = vlaneseq
    %v895 = vshrl.u32 %v894, 7
    %v896 = vsub.s32 %v893, %v895
    %v897 = vrot.slane %v889, %v896
    %v899 = vunpack.c.l.s4 1934713408
    %v900 = vunpack.c.0.s8 %v899
    %v901 = vlaneseq
    %v902 = vshrl.u32 %v901, 7
    %v903 = vsub.s32 %v900, %v902
    %v904 = vrot.slane %v890, %v903
    %v905 = vcombine.low %v872, %v888
    %v906 = vcombine.high %v872, %v888
    %v908 = vunpack.c.l.s4 1934713408
    %v909 = vunpack.c.0.s8 %v908
    %v910 = vlaneseq
    %v911 = vshrl.u32 %v910, 7
    %v912 = vsub.s32 %v909, %v911
    %v913 = vrot.slane %v905, %v912
    %v915 = vunpack.c.l.s4 1934713408
    %v916 = vunpack.c.0.s8 %v915
    %v917 = vlaneseq
    %v918 = vshrl.u32 %v917, 7
    %v919 = vsub.s32 %v916, %v918
    %v920 = vrot.slane %v906, %v919
    %v921 = vcombine.low %v897, %v913
    %v922 = vcombine.high %v897, %v913
    %v923 = vcombine.low %v904, %v920
    %v924 = vcombine.high %v904, %v920
    %925 = vst [vmem:[#allocation3] sm:$0xff] %v853
    %926 = vst [vmem:[#allocation3 + $0x8] sm:$0xff] %v854
    %927 = vst [vmem:[#allocation3 + $0x10] sm:$0xff] %v855
    %928 = vst [vmem:[#allocation3 + $0x18] sm:$0xff] %v856
    %929 = vst [vmem:[#allocation3 + $0x20] sm:$0xff] %v921
    %930 = vst [vmem:[#allocation3 + $0x28] sm:$0xff] %v922
    %931 = vst [vmem:[#allocation3 + $0x30] sm:$0xff] %v923
    %932 = vst [vmem:[#allocation3 + $0x38] sm:$0xff] %v924
    %v933 = vld [vmem:[#allocation2] sm:$0xff]
    %vm934 = vcmp.ge.f32.partialorder %v933, 0.5
    %v935 = vsel %vm934, 1, 0
    %v936 = vcvt.s32.f32 %v935
    %v937 = vld [vmem:[#allocation3] sm:$0xff]
    %v938 = vmul.f32 %v933, 0.2
    %v939 = vsub.f32 1.0, %v936
    %v940 = vmul.f32 %v938, %v939
    %v941 = vadd.f32 %v940, %v937
    %vm942 = vcmp.ge.f32.partialorder %v941, 0.5
    %v943 = vsel %vm942, 1, 0
    %v944 = vcvt.s32.f32 %v943
    %v945 = vadd.f32 %v944, 0.0
    %s946 = scalar_lea.vmem [#allocation3], 8
    %v947 = vld [vmem:[%s946] sm:$0xff]
    %v948 = vmul.f32 %v941, 0.2
    %v949 = vsub.f32 1.0, %v944
    %v950 = vmul.f32 %v948, %v949
    %v951 = vadd.f32 %v950, %v947
    %vm952 = vcmp.ge.f32.partialorder %v951, 0.5
    %v953 = vsel %vm952, 1, 0
    %v954 = vcvt.s32.f32 %v953
    %v955 = vadd.f32 %v945, %v954
    %s956 = scalar_lea.vmem [#allocation3], 16
    %v957 = vld [vmem:[%s956] sm:$0xff]
    %v958 = vmul.f32 %v951, 0.2
    %v959 = vsub.f32 1.0, %v954
    %v960 = vmul.f32 %v958, %v959
    %v961 = vadd.f32 %v960, %v957
    %vm962 = vcmp.ge.f32.partialorder %v961, 0.5
    %v963 = vsel %vm962, 1, 0
    %v964 = vcvt.s32.f32 %v963
    %v965 = vadd.f32 %v955, %v964
    %s966 = scalar_lea.vmem [#allocation3], 24
    %v967 = vld [vmem:[%s966] sm:$0xff]
    %v968 = vmul.f32 %v961, 0.2
    %v969 = vsub.f32 1.0, %v964
    %v970 = vmul.f32 %v968, %v969
    %v971 = vadd.f32 %v970, %v967
    %vm972 = vcmp.ge.f32.partialorder %v971, 0.5
    %v973 = vsel %vm972, 1, 0
    %v974 = vcvt.s32.f32 %v973
    %v975 = vadd.f32 %v965, %v974
    %s976 = scalar_lea.vmem [#allocation3], 32
    %v977 = vld [vmem:[%s976] sm:$0xff]
    %v978 = vmul.f32 %v971, 0.2
    %v979 = vsub.f32 1.0, %v974
    %v980 = vmul.f32 %v978, %v979
    %v981 = vadd.f32 %v980, %v977
    %vm982 = vcmp.ge.f32.partialorder %v981, 0.5
    %v983 = vsel %vm982, 1, 0
    %v984 = vcvt.s32.f32 %v983
    %v985 = vadd.f32 %v975, %v984
    %s986 = scalar_lea.vmem [#allocation3], 40
    %v987 = vld [vmem:[%s986] sm:$0xff]
    %v988 = vmul.f32 %v981, 0.2
    %v989 = vsub.f32 1.0, %v984
    %v990 = vmul.f32 %v988, %v989
    %v991 = vadd.f32 %v990, %v987
    %vm992 = vcmp.ge.f32.partialorder %v991, 0.5
    %v993 = vsel %vm992, 1, 0
    %v994 = vcvt.s32.f32 %v993
    %v995 = vadd.f32 %v985, %v994
    %s996 = scalar_lea.vmem [#allocation3], 48
    %v997 = vld [vmem:[%s996] sm:$0xff]
    %v998 = vmul.f32 %v991, 0.2
    %v999 = vsub.f32 1.0, %v994
    %v1000 = vmul.f32 %v998, %v999
    %v1001 = vadd.f32 %v1000, %v997
    %vm1002 = vcmp.ge.f32.partialorder %v1001, 0.5
    %v1003 = vsel %vm1002, 1, 0
    %v1004 = vcvt.s32.f32 %v1003
    %v1005 = vadd.f32 %v995, %v1004
    %s1006 = scalar_lea.vmem [#allocation3], 56
    %v1007 = vld [vmem:[%s1006] sm:$0xff]
    %v1008 = vmul.f32 %v1001, 0.2
    %v1009 = vsub.f32 1.0, %v1004
    %v1010 = vmul.f32 %v1008, %v1009
    %v1011 = vadd.f32 %v1010, %v1007
    %vm1012 = vcmp.ge.f32.partialorder %v1011, 0.5
    %v1013 = vsel %vm1012, 1, 0
    %v1014 = vcvt.s32.f32 %v1013
    %v1015 = vadd.f32 %v1005, %v1014
    %1016 = vst [vmem:[#allocation2] sm:$0xff] %v1011
    %v1017 = vld [vmem:[#allocation9] sm:$0xff]
    %v1018 = vadd.f32 %v1017, %v1015
    %1019 = vst [vmem:[#allocation9] sm:$0xff] %v1018
    // Predicated region
    $region26: #{tpu_custom_call.1} parent=1 // pred_check
      %p1020 = pneg %p44
    $region27: #{tpu_custom_call.1} parent=1 // pred_check_branch
      %1022 = sbr.rel (%p1020) target = $region29
    $region28: #{tpu_custom_call.1} parent=1 // pred_region
      %v1023 = vld [vmem:[#allocation9] sm:$0xff]
      %v1024 = vmul.f32 %v1023, 0.02
      %1025 = vst [vmem:[#allocation9] sm:$0xff] %v1024
    $region29: #{tpu_custom_call.1} parent=1 // pred_fallthru
      _
    // Predicated region
    $region30: #{tpu_custom_call.1} parent=1 // pred_check
      _
    $region31: #{tpu_custom_call.1} parent=1 // pred_check_branch
      %1027 = sbr.rel (0) target = $region33
    $region32: #{tpu_custom_call.1} parent=1 // pred_region
      %s1029 = ssub.s32 128, 128
      %1030 = vsyncadd [#allocation6], %s1029
      %s1032 = sshll.u32 [#allocation9], 4
      %s1033 = int_to_ptr.vmem [resolvable:$true] %s1032
      %1035 = dma.vmem_to_hbm [thread:$0]  %s1033, 128, %s3, [#allocation6]
    $region33: #{tpu_custom_call.1} parent=1 // pred_fallthru
      _
    // Predicated region
    $region34: #{tpu_custom_call.1} parent=1 // pred_check
      _
    $region35: #{tpu_custom_call.1} parent=1 // pred_check_branch
      %1037 = sbr.rel (0) target = $region37
    $region36: #{tpu_custom_call.1} parent=1 // pred_region
      %1038 = dma.done [#allocation6], 128
    $region37: #{tpu_custom_call.1} parent=1 // pred_fallthru
      _
    %1039 = vsyncpa [#allocation5], 1
    %1040 = vsyncpa [#allocation8], 1
    %1041 = vsyncpa [#allocation6], 1

</llo_original>
